<compile_context>
chip_gen: v5e
topology: v5e:2x2
jax: 0.10.0
libtpu: 0.0.40
codegen_flags: <defaults>
</compile_context>

<pallas_src>
import jax
import jax.numpy as jnp
from jax.experimental import pallas as pl
from jax.experimental.pallas import tpu as pltpu

LANES = 128
MAX_ROW_TILE = 1024   # (1024, 128) f32 block = 512 KiB; gains flatten past this
CORE_SPLITS = 2       # leading "parallel" grid axis (v7x has 2 TensorCores)


def _cdiv(a, b):
    return (a + b - 1) // b


def _round_up(x, m):
    return _cdiv(x, m) * m


def _depth_l1_kernel(out_ref, tgt_ref, msk_ref, num_ref, den_ref):
    # out_ref: model output (logits), tgt_ref: target depth, msk_ref: mask.
    # num_ref / den_ref: per-core (8, 128) f32 partial sums (revisited across
    # the inner "arbitrary" grid axis -> they act as resident accumulators).
    i = pl.program_id(1)

    @pl.when(i == 0)
    def _():
        num_ref[...] = jnp.zeros_like(num_ref)
        den_ref[...] = jnp.zeros_like(den_ref)

    o = out_ref[...].astype(jnp.float32)
    t = tgt_ref[...].astype(jnp.float32)
    m = msk_ref[...].astype(jnp.float32)

    # 1 / (sigmoid(x) + 1e-6) - 1  (kept exactly as PyTorch; no exp(-x)
    # shortcut, which would change numerics for strongly negative logits).
    pred = 1.0 / (jax.nn.sigmoid(o) + 1e-6) - 1.0

    # Mask folded: |pred*m - t*m| == |pred - t| * m for a 0/1 mask.
    diff = jnp.abs(pred - t) * m

    # Reduce only along the sublane-block axis (VPU vreg adds, no per-step
    # cross-lane XLU reduce); accumulator stays vreg-shaped (8, 128).
    num_ref[...] += diff.reshape(-1, 8, LANES).sum(axis=0)
    den_ref[...] += m.reshape(-1, 8, LANES).sum(axis=0)


@jax.jit
def depth_l1_loss(output, target, mask):
    """Pallas implementation of DepthL1Loss.forward. Returns a scalar f32."""
    n = output.size
    rows = _cdiv(n, LANES)

    # Tile sizing: big blocks for big inputs, full extent for small ones.
    row_tile = min(MAX_ROW_TILE, _round_up(rows, 8))
    blocks_per_core = _cdiv(rows, row_tile * CORE_SPLITS)
    rows_padded = row_tile * CORE_SPLITS * blocks_per_core
    n_padded = rows_padded * LANES

    def _slab(x):
        # Keep native dtype (kernel upcasts); pad only when shapes don't
        # already align with the tiling (mask pads with 0 -> no contribution).
        xf = jnp.ravel(x)
        if n_padded != n:
            xf = jnp.pad(xf, (0, n_padded - n))
        return xf.reshape(rows_padded, LANES)

    o2, t2, m2 = _slab(output), _slab(target), _slab(mask)

    def in_index_map(c, i):
        return (c * blocks_per_core + i, 0)

    def out_index_map(c, i):
        return (c, 0)

    tile_spec = pl.BlockSpec((row_tile, LANES), in_index_map)
    part_spec = pl.BlockSpec((8, LANES), out_index_map)
    part_shape = jax.ShapeDtypeStruct((CORE_SPLITS * 8, LANES), jnp.float32)

    num_part, den_part = pl.pallas_call(
        _depth_l1_kernel,
        out_shape=(part_shape, part_shape),
        grid_spec=pltpu.PrefetchScalarGridSpec(
            num_scalar_prefetch=0,
            grid=(CORE_SPLITS, blocks_per_core),
            in_specs=[tile_spec, tile_spec, tile_spec],
            out_specs=(part_spec, part_spec),
        ),
        compiler_params=pltpu.CompilerParams(
            dimension_semantics=("parallel", "arbitrary"),
        ),
    )(o2, t2, m2)

    # One final cross-lane reduce + scalar divide on tiny partials.
    # NOTE: all-zero mask yields Inf/NaN, matching the PyTorch reference.
    return jnp.sum(num_part) / jnp.sum(den_part)


def _reference(output, target, mask):
    pred = 1.0 / (jax.nn.sigmoid(output.astype(jnp.float32)) + 1e-6) - 1.0
    num = jnp.sum(jnp.abs(pred * mask - target * mask))
    return num / jnp.sum(mask)


if __name__ == "__main__":
    key = jax.random.PRNGKey(0)
    k1, k2, k3 = jax.random.split(key, 3)

    # Small NCHW shapes consistent with a depth-prediction head.
    N, C, H, W = 2, 4, 16, 16
    output = jax.random.normal(k1, (N, C, H, W), dtype=jnp.float32)
    target = jax.random.uniform(k2, (N, C, H, W), dtype=jnp.float32) * 5.0
    mask = (jax.random.uniform(k3, (N, C, H, W)) > 0.3).astype(jnp.float32)

    loss = jax.block_until_ready(depth_l1_loss(output, target, mask))
    ref = jax.block_until_ready(_reference(output, target, mask))
    assert jnp.allclose(loss, ref, rtol=1e-5, atol=1e-5), (loss, ref)

    print("KERNEL_OK")
</pallas_src>

<mosaic_0001>
module attributes {stable_mosaic.version = 11 : i64} {
  func.func @_depth_l1_kernel(%arg0: i32, %arg1: i32, %arg2: memref<16x128xf32, #tpu.memory_space<vmem>>, %arg3: memref<16x128xf32, #tpu.memory_space<vmem>>, %arg4: memref<16x128xf32, #tpu.memory_space<vmem>>, %arg5: memref<8x128xf32, #tpu.memory_space<vmem>>, %arg6: memref<8x128xf32, #tpu.memory_space<vmem>>) attributes {dimension_semantics = [#tpu.dimension_semantics<parallel>, #tpu.dimension_semantics<arbitrary>], iteration_bounds = array<i64: 2, 1>, scalar_prefetch = 0 : i64, scratch_operands = 0 : i64, tpu.core_type = #tpu.core_type<tc>, window_params = [{transform_indices = @transform_0, window_bounds = array<i64: 16, 128>}, {transform_indices = @transform_1, window_bounds = array<i64: 16, 128>}, {transform_indices = @transform_2, window_bounds = array<i64: 16, 128>}, {transform_indices = @transform_3, window_bounds = array<i64: 8, 128>}, {transform_indices = @transform_4, window_bounds = array<i64: 8, 128>}]} {
    %c0_i32 = arith.constant 0 : i32
    %0 = arith.cmpi eq, %arg1, %c0_i32 : i32
    %1 = arith.extui %0 : i1 to i32
    %c0_i32_0 = arith.constant 0 : i32
    %2 = arith.cmpi ne, %1, %c0_i32_0 : i32
    scf.if %2 {
      %cst_19 = arith.constant 0.000000e+00 : f32
      %30 = vector.broadcast %cst_19 : f32 to vector<8x128xf32>
      %c0_20 = arith.constant 0 : index
      %c0_21 = arith.constant 0 : index
      %31 = vector.load %arg5[%c0_20, %c0_21] : memref<8x128xf32, #tpu.memory_space<vmem>>, vector<8x128xf32>
      tpu.vector_store %arg5[%c0_20, %c0_21], %30 {strides = array<i32>} : memref<8x128xf32, #tpu.memory_space<vmem>>, vector<8x128xf32>,
      %cst_22 = arith.constant 0.000000e+00 : f32
      %32 = vector.broadcast %cst_22 : f32 to vector<8x128xf32>
      %c0_23 = arith.constant 0 : index
      %c0_24 = arith.constant 0 : index
      %33 = vector.load %arg6[%c0_23, %c0_24] : memref<8x128xf32, #tpu.memory_space<vmem>>, vector<8x128xf32>
      tpu.vector_store %arg6[%c0_23, %c0_24], %32 {strides = array<i32>} : memref<8x128xf32, #tpu.memory_space<vmem>>, vector<8x128xf32>,
    } else {
    }
    %c0 = arith.constant 0 : index
    %c0_1 = arith.constant 0 : index
    %3 = vector.load %arg2[%c0, %c0_1] : memref<16x128xf32, #tpu.memory_space<vmem>>, vector<16x128xf32>
    %c0_2 = arith.constant 0 : index
    %c0_3 = arith.constant 0 : index
    %4 = vector.load %arg3[%c0_2, %c0_3] : memref<16x128xf32, #tpu.memory_space<vmem>>, vector<16x128xf32>
    %c0_4 = arith.constant 0 : index
    %c0_5 = arith.constant 0 : index
    %5 = vector.load %arg4[%c0_4, %c0_5] : memref<16x128xf32, #tpu.memory_space<vmem>>, vector<16x128xf32>
    %6 = arith.negf %3 : vector<16x128xf32>
    %7 = math.exp %6 : vector<16x128xf32>
    %cst = arith.constant 1.000000e+00 : f32
    %8 = vector.broadcast %cst : f32 to vector<16x128xf32>
    %9 = arith.addf %8, %7 : vector<16x128xf32>
    %10 = arith.divf %8, %9 : vector<16x128xf32>
    %cst_6 = arith.constant 9.99999997E-7 : f32
    %11 = vector.broadcast %cst_6 : f32 to vector<16x128xf32>
    %12 = arith.addf %10, %11 : vector<16x128xf32>
    %cst_7 = arith.constant 1.000000e+00 : f32
    %13 = vector.broadcast %cst_7 : f32 to vector<16x128xf32>
    %14 = arith.divf %13, %12 : vector<16x128xf32>
    %cst_8 = arith.constant 1.000000e+00 : f32
    %15 = vector.broadcast %cst_8 : f32 to vector<16x128xf32>
    %16 = arith.subf %14, %15 : vector<16x128xf32>
    %17 = arith.subf %16, %4 : vector<16x128xf32>
    %18 = math.absf %17 : vector<16x128xf32>
    %19 = arith.mulf %18, %5 : vector<16x128xf32>
    %c0_9 = arith.constant 0 : index
    %c0_10 = arith.constant 0 : index
    %20 = vector.load %arg5[%c0_9, %c0_10] : memref<8x128xf32, #tpu.memory_space<vmem>>, vector<8x128xf32>
    %21 = vector.shape_cast %19 : vector<16x128xf32> to vector<2x8x128xf32>
    %cst_11 = arith.constant dense<0.000000e+00> : vector<8x128xf32>
    %22 = vector.multi_reduction <add>, %21, %cst_11 [0] : vector<2x8x128xf32> to vector<8x128xf32>
    %23 = arith.addf %20, %22 : vector<8x128xf32>
    %c0_12 = arith.constant 0 : index
    %c0_13 = arith.constant 0 : index
    %24 = vector.load %arg5[%c0_12, %c0_13] : memref<8x128xf32, #tpu.memory_space<vmem>>, vector<8x128xf32>
    tpu.vector_store %arg5[%c0_12, %c0_13], %23 {strides = array<i32>} : memref<8x128xf32, #tpu.memory_space<vmem>>, vector<8x128xf32>,
    %c0_14 = arith.constant 0 : index
    %c0_15 = arith.constant 0 : index
    %25 = vector.load %arg6[%c0_14, %c0_15] : memref<8x128xf32, #tpu.memory_space<vmem>>, vector<8x128xf32>
    %26 = vector.shape_cast %5 : vector<16x128xf32> to vector<2x8x128xf32>
    %cst_16 = arith.constant dense<0.000000e+00> : vector<8x128xf32>
    %27 = vector.multi_reduction <add>, %26, %cst_16 [0] : vector<2x8x128xf32> to vector<8x128xf32>
    %28 = arith.addf %25, %27 : vector<8x128xf32>
    %c0_17 = arith.constant 0 : index
    %c0_18 = arith.constant 0 : index
    %29 = vector.load %arg6[%c0_17, %c0_18] : memref<8x128xf32, #tpu.memory_space<vmem>>, vector<8x128xf32>
    tpu.vector_store %arg6[%c0_17, %c0_18], %28 {strides = array<i32>} : memref<8x128xf32, #tpu.memory_space<vmem>>, vector<8x128xf32>,
    return
  }
  func.func @transform_0(%arg0: i32, %arg1: i32) -> (i32, i32) {
    %c1_i32 = arith.constant 1 : i32
    %0 = arith.muli %arg0, %c1_i32 : i32
    %1 = arith.addi %0, %arg1 : i32
    %c0_i32 = arith.constant 0 : i32
    %c0_i32_0 = arith.constant 0 : i32
    return %1, %c0_i32 : i32, i32
  }
  func.func @transform_1(%arg0: i32, %arg1: i32) -> (i32, i32) {
    %c1_i32 = arith.constant 1 : i32
    %0 = arith.muli %arg0, %c1_i32 : i32
    %1 = arith.addi %0, %arg1 : i32
    %c0_i32 = arith.constant 0 : i32
    %c0_i32_0 = arith.constant 0 : i32
    return %1, %c0_i32 : i32, i32
  }
  func.func @transform_2(%arg0: i32, %arg1: i32) -> (i32, i32) {
    %c1_i32 = arith.constant 1 : i32
    %0 = arith.muli %arg0, %c1_i32 : i32
    %1 = arith.addi %0, %arg1 : i32
    %c0_i32 = arith.constant 0 : i32
    %c0_i32_0 = arith.constant 0 : i32
    return %1, %c0_i32 : i32, i32
  }
  func.func @transform_3(%arg0: i32, %arg1: i32) -> (i32, i32) {
    %c0_i32 = arith.constant 0 : i32
    %c0_i32_0 = arith.constant 0 : i32
    return %arg0, %c0_i32 : i32, i32
  }
  func.func @transform_4(%arg0: i32, %arg1: i32) -> (i32, i32) {
    %c0_i32 = arith.constant 0 : i32
    %c0_i32_0 = arith.constant 0 : i32
    return %arg0, %c0_i32 : i32, i32
  }
}

</mosaic_0001>

<llo_original>
// kernel: depth_l1_loss.1
$region0: #{depth_l1_loss.1}
  #allocation0 [shape = 'u32[]', space=smem, size = 0x4, offset = 0x4, fixed_abs, tag = 'smem constant byte address 0x4 - core index']
  #allocation1 [shape = 'u32[72,128]{1,0:T(1,128)}', space=vmem, size = 0x9000, scoped, tag = 'internal scratch']
  %s0 = inlined_call_operand.vmem [shape: f32[32,128], index: 0, kind: input, shape index: {}]
  %s1 = inlined_call_operand.vmem [shape: f32[32,128], index: 1, kind: input, shape index: {}]
  %s2 = inlined_call_operand.vmem [shape: f32[32,128], index: 2, kind: input, shape index: {}]
  %s3 = inlined_call_operand.vmem [shape: f32[16,128], index: 3, kind: output, shape index: {0}]
  %s4 = inlined_call_operand.vmem [shape: f32[16,128], index: 4, kind: output, shape index: {1}]
  %5 = xla_tuple %s3, %s4
  %s6 = sld [smem:[#allocation0]]
  $region57: #{depth_l1_loss.1} parent=0
    _
  %s8 = ssub.s32 1, %s6
  %s9 = scalar_select 0, %s8, %s6
  loop: start=0, step=1, limit=4
  $region2: #{depth_l1_loss.1} parent=0 // loop_pre_header
    _
  $region3: #{depth_l1_loss.1} parent=0 // loop_header
    %s11 = sphi 0, %s15
    %p12 = scmp.ge.s32.totalorder %s11, 4
    %s18 = sphi 0, %s30
    %s19 = sphi 0, %s26
    %s20 = sphi 0, %s18
    %s21 = sphi 0, %s19
    %s22 = sphi 0, %s20
    %s23 = sphi 0, %s21
    %s35 = sphi 0, %s37
    %s38 = sphi 0, %s35
    %s39 = sphi 0, %s38
    %s55 = sphi 0, %s39
    %s63 = sphi 0, %s65
    %s66 = sphi 0, %s63
    %s67 = sphi 0, %s66
    %s83 = sphi 0, %s67
    %s91 = sphi 0, %s93
    %s94 = sphi 0, %s91
    %s95 = sphi 0, %s94
    %s111 = sphi 0, %s95
    %s117 = sphi 0, %s119
    %s120 = sphi 0, %s117
    %s121 = sphi 0, %s120
    %s137 = sphi 0, %s121
    %s143 = sphi 0, %s145
    %s146 = sphi 0, %s143
    %s147 = sphi 0, %s146
    %s163 = sphi 0, %s147
  $region4: #{depth_l1_loss.1} parent=0 // loop_header_branch
    %14 = sbr.rel (%p12) target = $region8
  $region5: #{depth_l1_loss.1} parent=0 // loop_body
    %s16 = ssub.s32 %s11, 1
    %s17 = ssub.s32 %s11, 2
    %s24 = sadd.s32 1, %s19
    %p25 = scmp.ge.s32.totalorder %s24, 1
    %s26 = scalar_select %p25, 0, %s24
    %s27 = sadd.s32 1, %s18
    %s28 = scalar_select %p25, %s27, %s18
    %p29 = scmp.ge.s32.totalorder %s28, 2
    %s30 = scalar_select %p29, 0, %s28
    %s31 = sadd.s32 %s18, %s19
    %s32 = sadd.s32 %s30, %s26
    %s33 = ssub.s32 %s31, %s32
    %p34 = scmp.eq.s32.totalorder %s33, 0
    %s36 = sadd.s32 %s35, 1
    %s37 = scalar_select %p34, %s35, %s36
    %p40 = pneg %p34
    %p41 = scmp.eq.s32.totalorder %s11, 1
    %p42 = por %p40, %p41
    %p43 = scmp.ne.s32.totalorder %s35, %s38
    %p44 = scmp.eq.s32.totalorder %s11, 0
    %p45 = por %p43, %p44
    %p46 = scmp.ne.s32.totalorder %s35, %s38
    %p47 = scmp.eq.s32.totalorder %s16, 1
    %p48 = por %p46, %p47
    %p49 = scmp.ne.s32.totalorder %s38, %s39
    %p50 = scmp.eq.s32.totalorder %s16, 0
    %p51 = por %p49, %p50
    %p52 = scmp.ne.s32.totalorder %s38, %s39
    %p53 = scmp.eq.s32.totalorder %s17, 1
    %p54 = por %p52, %p53
    %p56 = scmp.ne.s32.totalorder %s39, %s55
    %p57 = scmp.eq.s32.totalorder %s17, 0
    %p58 = por %p56, %p57
    %s59 = sadd.s32 %s18, %s19
    %s60 = sadd.s32 %s30, %s26
    %s61 = ssub.s32 %s59, %s60
    %p62 = scmp.eq.s32.totalorder %s61, 0
    %s64 = sadd.s32 %s63, 1
    %s65 = scalar_select %p62, %s63, %s64
    %p68 = pneg %p62
    %p69 = scmp.eq.s32.totalorder %s11, 1
    %p70 = por %p68, %p69
    %p71 = scmp.ne.s32.totalorder %s63, %s66
    %p72 = scmp.eq.s32.totalorder %s11, 0
    %p73 = por %p71, %p72
    %p74 = scmp.ne.s32.totalorder %s63, %s66
    %p75 = scmp.eq.s32.totalorder %s16, 1
    %p76 = por %p74, %p75
    %p77 = scmp.ne.s32.totalorder %s66, %s67
    %p78 = scmp.eq.s32.totalorder %s16, 0
    %p79 = por %p77, %p78
    %p80 = scmp.ne.s32.totalorder %s66, %s67
    %p81 = scmp.eq.s32.totalorder %s17, 1
    %p82 = por %p80, %p81
    %p84 = scmp.ne.s32.totalorder %s67, %s83
    %p85 = scmp.eq.s32.totalorder %s17, 0
    %p86 = por %p84, %p85
    %s87 = sadd.s32 %s18, %s19
    %s88 = sadd.s32 %s30, %s26
    %s89 = ssub.s32 %s87, %s88
    %p90 = scmp.eq.s32.totalorder %s89, 0
    %s92 = sadd.s32 %s91, 1
    %s93 = scalar_select %p90, %s91, %s92
    %p96 = pneg %p90
    %p97 = scmp.eq.s32.totalorder %s11, 1
    %p98 = por %p96, %p97
    %p99 = scmp.ne.s32.totalorder %s91, %s94
    %p100 = scmp.eq.s32.totalorder %s11, 0
    %p101 = por %p99, %p100
    %p102 = scmp.ne.s32.totalorder %s91, %s94
    %p103 = scmp.eq.s32.totalorder %s16, 1
    %p104 = por %p102, %p103
    %p105 = scmp.ne.s32.totalorder %s94, %s95
    %p106 = scmp.eq.s32.totalorder %s16, 0
    %p107 = por %p105, %p106
    %p108 = scmp.ne.s32.totalorder %s94, %s95
    %p109 = scmp.eq.s32.totalorder %s17, 1
    %p110 = por %p108, %p109
    %p112 = scmp.ne.s32.totalorder %s95, %s111
    %p113 = scmp.eq.s32.totalorder %s17, 0
    %p114 = por %p112, %p113
    %s115 = ssub.s32 %s18, %s30
    %p116 = scmp.eq.s32.totalorder %s115, 0
    %s118 = sadd.s32 %s117, 1
    %s119 = scalar_select %p116, %s117, %s118
    %p122 = pneg %p116
    %p123 = scmp.eq.s32.totalorder %s11, 1
    %p124 = por %p122, %p123
    %p125 = scmp.ne.s32.totalorder %s117, %s120
    %p126 = scmp.eq.s32.totalorder %s11, 0
    %p127 = por %p125, %p126
    %p128 = scmp.ne.s32.totalorder %s117, %s120
    %p129 = scmp.eq.s32.totalorder %s16, 1
    %p130 = por %p128, %p129
    %p131 = scmp.ne.s32.totalorder %s120, %s121
    %p132 = scmp.eq.s32.totalorder %s16, 0
    %p133 = por %p131, %p132
    %p134 = scmp.ne.s32.totalorder %s120, %s121
    %p135 = scmp.eq.s32.totalorder %s17, 1
    %p136 = por %p134, %p135
    %p138 = scmp.ne.s32.totalorder %s121, %s137
    %p139 = scmp.eq.s32.totalorder %s17, 0
    %p140 = por %p138, %p139
    %s141 = ssub.s32 %s18, %s30
    %p142 = scmp.eq.s32.totalorder %s141, 0
    %s144 = sadd.s32 %s143, 1
    %s145 = scalar_select %p142, %s143, %s144
    %p148 = pneg %p142
    %p149 = scmp.eq.s32.totalorder %s11, 1
    %p150 = por %p148, %p149
    %p151 = scmp.ne.s32.totalorder %s143, %s146
    %p152 = scmp.eq.s32.totalorder %s11, 0
    %p153 = por %p151, %p152
    %p154 = scmp.ne.s32.totalorder %s143, %s146
    %p155 = scmp.eq.s32.totalorder %s16, 1
    %p156 = por %p154, %p155
    %p157 = scmp.ne.s32.totalorder %s146, %s147
    %p158 = scmp.eq.s32.totalorder %s16, 0
    %p159 = por %p157, %p158
    %p160 = scmp.ne.s32.totalorder %s146, %s147
    %p161 = scmp.eq.s32.totalorder %s17, 1
    %p162 = por %p160, %p161
    %p164 = scmp.ne.s32.totalorder %s147, %s163
    %p165 = scmp.eq.s32.totalorder %s17, 0
    %p166 = por %p164, %p165
    %p167 = scmp.le.s32.totalorder 1, %s11
    %p168 = scmp.lt.s32.totalorder %s11, 3
    %p169 = pnand %p167, %p168
    %p170 = pneg %p169
    // Predicated region
    $region9: #{depth_l1_loss.1} parent=5 // pred_check
      _
    $region10: #{depth_l1_loss.1} parent=5 // pred_check_branch
      %172 = sbr.rel (%p169) target = $region12
    $region11: #{depth_l1_loss.1} parent=5 // pred_region
      %s173 = ssub.s32 %s11, 1
    $region12: #{depth_l1_loss.1} parent=5 // pred_fallthru
      _
    %p174 = scmp.lt.s32.totalorder %s11, 2
    // Predicated region
    $region13: #{depth_l1_loss.1} parent=5 // pred_check
      %p175 = pneg %p174
    $region14: #{depth_l1_loss.1} parent=5 // pred_check_branch
      %177 = sbr.rel (%p175) target = $region16
    $region15: #{depth_l1_loss.1} parent=5 // pred_region
      // Predicated region
      $region17: #{depth_l1_loss.1} parent=15 // pred_check
        %p178 = pneg %p45
      $region18: #{depth_l1_loss.1} parent=15 // pred_check_branch
        %180 = sbr.rel (%p178) target = $region20
      $region19: #{depth_l1_loss.1} parent=15 // pred_region
        %s181 = sadd.s32 %s18, %s19
        %s182 = smul.u32 2, %s181
        %p183 = scmp.lt.s32.totalorder %s182, 3
        %s184 = scalar_select %p183, %s182, 3
        %s185 = smul.addr %s184, 8
        %s186 = scalar_lea.vmem %s0, %s185
        %s187 = sadd.s32 %s18, %s19
        %s188 = smul.u32 2, %s187
      $region20: #{depth_l1_loss.1} parent=15 // pred_fallthru
        _
      // Predicated region
      $region21: #{depth_l1_loss.1} parent=15 // pred_check
        %p189 = pneg %p73
      $region22: #{depth_l1_loss.1} parent=15 // pred_check_branch
        %191 = sbr.rel (%p189) target = $region24
      $region23: #{depth_l1_loss.1} parent=15 // pred_region
        %s192 = sadd.s32 %s18, %s19
        %s193 = smul.u32 2, %s192
        %p194 = scmp.lt.s32.totalorder %s193, 3
        %s195 = scalar_select %p194, %s193, 3
        %s196 = smul.addr %s195, 8
        %s197 = scalar_lea.vmem %s1, %s196
        %s198 = sadd.s32 %s18, %s19
        %s199 = smul.u32 2, %s198
      $region24: #{depth_l1_loss.1} parent=15 // pred_fallthru
        _
      // Predicated region
      $region25: #{depth_l1_loss.1} parent=15 // pred_check
        %p200 = pneg %p101
      $region26: #{depth_l1_loss.1} parent=15 // pred_check_branch
        %202 = sbr.rel (%p200) target = $region28
      $region27: #{depth_l1_loss.1} parent=15 // pred_region
        %s203 = sadd.s32 %s18, %s19
        %s204 = smul.u32 2, %s203
        %p205 = scmp.lt.s32.totalorder %s204, 3
        %s206 = scalar_select %p205, %s204, 3
        %s207 = smul.addr %s206, 8
        %s208 = scalar_lea.vmem %s2, %s207
        %s209 = sadd.s32 %s18, %s19
        %s210 = smul.u32 2, %s209
      $region28: #{depth_l1_loss.1} parent=15 // pred_fallthru
        _
    $region16: #{depth_l1_loss.1} parent=5 // pred_fallthru
      _
    %p211 = scmp.le.s32.totalorder 1, %s11
    %p212 = scmp.lt.s32.totalorder %s11, 3
    %p213 = pnand %p211, %p212
    %p214 = pneg %p213
    // Predicated region
    $region29: #{depth_l1_loss.1} parent=5 // pred_check
      _
    $region30: #{depth_l1_loss.1} parent=5 // pred_check_branch
      %216 = sbr.rel (%p213) target = $region32
    $region31: #{depth_l1_loss.1} parent=5 // pred_region
      %s217 = ssub.s32 %s11, 1
      %s218 = sadd.s32 %s20, %s21
      %s219 = smul.u32 2, %s218
      %p220 = scmp.lt.s32.totalorder %s219, 3
      %s221 = scalar_select %p220, %s219, 3
      %s222 = smul.addr %s221, 8
      %s223 = scalar_lea.vmem %s0, %s222
      %p224 = pneg %p51
      %p225 = pneg %p48
      %s226 = sadd.s32 %s20, %s21
      %s227 = smul.u32 2, %s226
      %p228 = scmp.lt.s32.totalorder %s227, 3
      %s229 = scalar_select %p228, %s227, 3
      %s230 = smul.addr %s229, 8
      %s231 = scalar_lea.vmem %s1, %s230
      %p232 = pneg %p79
      %p233 = pneg %p76
      %s234 = sadd.s32 %s20, %s21
      %s235 = smul.u32 2, %s234
      %p236 = scmp.lt.s32.totalorder %s235, 3
      %s237 = scalar_select %p236, %s235, 3
      %s238 = smul.addr %s237, 8
      %s239 = scalar_lea.vmem %s2, %s238
      %p240 = pneg %p107
      %p241 = pneg %p104
      %p242 = pneg %p133
      %p243 = pneg %p130
      %p244 = scmp.lt.s32.totalorder %s20, 1
      %s245 = scalar_select %p244, %s20, 1
      %s246 = smul.addr %s245, 8
      %s247 = scalar_lea.vmem %s3, %s246
      %p248 = pneg %p159
      %p249 = pneg %p156
      %p250 = scmp.lt.s32.totalorder %s20, 1
      %s251 = scalar_select %p250, %s20, 1
      %s252 = smul.addr %s251, 8
      %s253 = scalar_lea.vmem %s4, %s252
      %s254 = sadd.s32 %s20, %s21
      %s255 = smul.u32 2, %s254
      %p256 = scmp.lt.s32.totalorder %s255, 3
      %s257 = scalar_select %p256, %s255, 3
      %s258 = smul.addr %s257, 8
      %s259 = scalar_lea.vmem %s0, %s258
      %s260 = sadd.s32 %s20, %s21
      %s261 = smul.u32 2, %s260
      %s262 = sadd.s32 %s20, %s21
      %s263 = smul.u32 2, %s262
      %p264 = scmp.lt.s32.totalorder %s263, 3
      %s265 = scalar_select %p264, %s263, 3
      %s266 = smul.addr %s265, 8
      %s267 = scalar_lea.vmem %s1, %s266
      %s268 = sadd.s32 %s20, %s21
      %s269 = smul.u32 2, %s268
      %s270 = sadd.s32 %s20, %s21
      %s271 = smul.u32 2, %s270
      %p272 = scmp.lt.s32.totalorder %s271, 3
      %s273 = scalar_select %p272, %s271, 3
      %s274 = smul.addr %s273, 8
      %s275 = scalar_lea.vmem %s2, %s274
      %s276 = sadd.s32 %s20, %s21
      %s277 = smul.u32 2, %s276
      %p278 = scmp.lt.s32.totalorder %s20, 1
      %s279 = scalar_select %p278, %s20, 1
      %s280 = smul.addr %s279, 8
      %s281 = scalar_lea.vmem %s3, %s280
      %p282 = scmp.lt.s32.totalorder %s20, 1
      %s283 = scalar_select %p282, %s20, 1
      %s284 = smul.addr %s283, 8
      %s285 = scalar_lea.vmem %s4, %s284
      %p286 = scmp.eq.s32.totalorder %s21, 0
      // Predicated region
      $region33: #{depth_l1_loss.1} parent=31 // pred_check
        %p287 = pneg %p286
      $region34: #{depth_l1_loss.1} parent=31 // pred_check_branch
        %289 = sbr.rel (%p287) target = $region36
      $region35: #{depth_l1_loss.1} parent=31 // pred_region
        %290 = vst [vmem:[%s281] sm:$0xff] 0.0
        %291 = vst [vmem:[%s285] sm:$0xff] 0.0
      $region36: #{depth_l1_loss.1} parent=31 // pred_fallthru
        _
      %v292 = vld [vmem:[%s259] sm:$0xff]
      %v293 = vld [vmem:[%s259 + $0x8] sm:$0xff]
      %v294 = vld [vmem:[%s267] sm:$0xff]
      %v295 = vld [vmem:[%s267 + $0x8] sm:$0xff]
      %v296 = vld [vmem:[%s275] sm:$0xff]
      %v297 = vld [vmem:[%s275 + $0x8] sm:$0xff]
      %v298 = vxor.u32 %v292, 2147483648
      %v299 = vxor.u32 %v293, 2147483648
      %v300 = vmul.f32 %v298, 1.442695
      %v301 = vpow.pop %v300
      %v302 = vmul.f32 %v299, 1.442695
      %v303 = vpow.pop %v302
      %v304 = vadd.f32 %v301, 1.0
      %v305 = vadd.f32 %v303, 1.0
      %v306 = vrcp.pop %v304
      %v307 = vmul.f32 %v304, %v306
      %v308 = vsub.f32 1.0, %v307
      %v309 = vmul.f32 %v306, %v308
      %v310 = vadd.f32 %v306, %v309
      %vm311 = vweird.f32 %v304
      %vm312 = vweird.f32 %v306
      %vm313 = vmor %vm311, %vm312
      %v314 = vsel %vm313, %v306, %v310
      %v315 = vand.u32 2147483647, %v304
      %vm316 = vcmp.eq.f32.partialorder %v315, 8.507059e+37
      %v317 = vand.u32 %v304, 2147483648
      %v318 = vor.u32 1.1754944e-38, %v317
      %v319 = vsel %vm316, %v318, %v314
      %v320 = vmul.f32 1.0, %v319
      %v321 = vrcp.pop %v305
      %v322 = vmul.f32 %v305, %v321
      %v323 = vsub.f32 1.0, %v322
      %v324 = vmul.f32 %v321, %v323
      %v325 = vadd.f32 %v321, %v324
      %vm326 = vweird.f32 %v305
      %vm327 = vweird.f32 %v321
      %vm328 = vmor %vm326, %vm327
      %v329 = vsel %vm328, %v321, %v325
      %v330 = vand.u32 2147483647, %v305
      %vm331 = vcmp.eq.f32.partialorder %v330, 8.507059e+37
      %v332 = vand.u32 %v305, 2147483648
      %v333 = vor.u32 1.1754944e-38, %v332
      %v334 = vsel %vm331, %v333, %v329
      %v335 = vmul.f32 1.0, %v334
      %v336 = vadd.f32 %v320, 1e-06
      %v337 = vadd.f32 %v335, 1e-06
      %v338 = vrcp.pop %v336
      %v339 = vmul.f32 %v336, %v338
      %v340 = vsub.f32 1.0, %v339
      %v341 = vmul.f32 %v338, %v340
      %v342 = vadd.f32 %v338, %v341
      %vm343 = vweird.f32 %v336
      %vm344 = vweird.f32 %v338
      %vm345 = vmor %vm343, %vm344
      %v346 = vsel %vm345, %v338, %v342
      %v347 = vand.u32 2147483647, %v336
      %vm348 = vcmp.eq.f32.partialorder %v347, 8.507059e+37
      %v349 = vand.u32 %v336, 2147483648
      %v350 = vor.u32 1.1754944e-38, %v349
      %v351 = vsel %vm348, %v350, %v346
      %v352 = vmul.f32 1.0, %v351
      %v353 = vrcp.pop %v337
      %v354 = vmul.f32 %v337, %v353
      %v355 = vsub.f32 1.0, %v354
      %v356 = vmul.f32 %v353, %v355
      %v357 = vadd.f32 %v353, %v356
      %vm358 = vweird.f32 %v337
      %vm359 = vweird.f32 %v353
      %vm360 = vmor %vm358, %vm359
      %v361 = vsel %vm360, %v353, %v357
      %v362 = vand.u32 2147483647, %v337
      %vm363 = vcmp.eq.f32.partialorder %v362, 8.507059e+37
      %v364 = vand.u32 %v337, 2147483648
      %v365 = vor.u32 1.1754944e-38, %v364
      %v366 = vsel %vm363, %v365, %v361
      %v367 = vmul.f32 1.0, %v366
      %v368 = vsub.f32 %v352, 1.0
      %v369 = vsub.f32 %v367, 1.0
      %v370 = vsub.f32 %v368, %v294
      %v371 = vsub.f32 %v369, %v295
      %v372 = vand.u32 2147483647, %v370
      %v373 = vand.u32 2147483647, %v371
      %v374 = vmul.f32 %v372, %v296
      %v375 = vmul.f32 %v373, %v297
      %v376 = vld [vmem:[%s281] sm:$0xff]
      %v377 = vadd.f32 %v374, %v375
      %v378 = vadd.f32 %v376, %v377
      %379 = vst [vmem:[%s281] sm:$0xff] %v378
      %v380 = vld [vmem:[%s285] sm:$0xff]
      %v381 = vadd.f32 %v296, %v297
      %v382 = vadd.f32 %v380, %v381
      %383 = vst [vmem:[%s285] sm:$0xff] %v382
      %p384 = scmp.lt.s32.totalorder %s20, 1
      %s385 = scalar_select %p384, %s20, 1
      %s386 = smul.addr %s385, 8
      %s387 = scalar_lea.vmem %s3, %s386
      %p388 = scmp.lt.s32.totalorder %s20, 1
      %s389 = scalar_select %p388, %s20, 1
      %s390 = smul.addr %s389, 8
      %s391 = scalar_lea.vmem %s4, %s390
      // Predicated region
      $region37: #{depth_l1_loss.1} parent=31 // pred_check
        %p392 = pneg %p130
      $region38: #{depth_l1_loss.1} parent=31 // pred_check_branch
        %394 = sbr.rel (%p392) target = $region40
      $region39: #{depth_l1_loss.1} parent=31 // pred_region
        _
      $region40: #{depth_l1_loss.1} parent=31 // pred_fallthru
        _
      // Predicated region
      $region41: #{depth_l1_loss.1} parent=31 // pred_check
        %p395 = pneg %p156
      $region42: #{depth_l1_loss.1} parent=31 // pred_check_branch
        %397 = sbr.rel (%p395) target = $region44
      $region43: #{depth_l1_loss.1} parent=31 // pred_region
        _
      $region44: #{depth_l1_loss.1} parent=31 // pred_fallthru
        _
    $region32: #{depth_l1_loss.1} parent=5 // pred_fallthru
      _
    %p398 = scmp.le.s32.totalorder 2, %s11
    // Predicated region
    $region45: #{depth_l1_loss.1} parent=5 // pred_check
      %p399 = pneg %p398
    $region46: #{depth_l1_loss.1} parent=5 // pred_check_branch
      %401 = sbr.rel (%p399) target = $region48
    $region47: #{depth_l1_loss.1} parent=5 // pred_region
      %s402 = ssub.s32 %s11, 2
      // Predicated region
      $region49: #{depth_l1_loss.1} parent=47 // pred_check
        %p403 = pneg %p136
      $region50: #{depth_l1_loss.1} parent=47 // pred_check_branch
        %405 = sbr.rel (%p403) target = $region52
      $region51: #{depth_l1_loss.1} parent=47 // pred_region
        %p406 = scmp.lt.s32.totalorder %s22, 1
        %s407 = scalar_select %p406, %s22, 1
        %s408 = smul.addr %s407, 8
        %s409 = scalar_lea.vmem %s3, %s408
      $region52: #{depth_l1_loss.1} parent=47 // pred_fallthru
        _
      // Predicated region
      $region53: #{depth_l1_loss.1} parent=47 // pred_check
        %p410 = pneg %p162
      $region54: #{depth_l1_loss.1} parent=47 // pred_check_branch
        %412 = sbr.rel (%p410) target = $region56
      $region55: #{depth_l1_loss.1} parent=47 // pred_region
        %p413 = scmp.lt.s32.totalorder %s22, 1
        %s414 = scalar_select %p413, %s22, 1
        %s415 = smul.addr %s414, 8
        %s416 = scalar_lea.vmem %s4, %s415
      $region56: #{depth_l1_loss.1} parent=47 // pred_fallthru
        _
    $region48: #{depth_l1_loss.1} parent=5 // pred_fallthru
      _
  $region6: #{depth_l1_loss.1} parent=0 // loop_footer
    %s15 = sadd.s32 1, %s11
  $region7: #{depth_l1_loss.1} parent=0 // loop_footer_branch
    %10 = sbr.rel target = $region3
  $region8: #{depth_l1_loss.1} parent=0 // loop_exit
    _

</llo_original>
